<compile_context>
chip_gen: v5e
topology: v5e:2x2
jax: 0.10.0
libtpu: 0.0.40
codegen_flags: <defaults>
</compile_context>

<pallas_src>
import functools

import jax
import jax.numpy as jnp
from jax.experimental import pallas as pl
from jax.experimental.pallas import tpu as pltpu


def _round_up(n, m):
    return ((n + m - 1) // m) * m


def _layer_norm(x_f32, gamma, beta, eps=1e-5):
    # x_f32: (TM, D) float32; gamma/beta: (1, D). Matches nn.LayerNorm(input_dim)
    # (normalize over last dim, biased variance, eps inside the sqrt).
    mean = jnp.mean(x_f32, axis=-1, keepdims=True)
    xc = x_f32 - mean
    var = jnp.mean(xc * xc, axis=-1, keepdims=True)
    inv = jax.lax.rsqrt(var + eps)
    return xc * inv * gamma.astype(jnp.float32) + beta.astype(jnp.float32)


def adapter_kernel(x_ref, wd_ref, bd_ref, wu_ref, pvec_ref, out_ref,
                   *, use_pre_ln, use_post_ln):
    # pvec_ref rows: 0=pre_gamma, 1=pre_beta, 2=post_gamma, 3=post_beta, 4=b_up
    x = x_ref[...]                                # (TM, D), model dtype
    x_f32 = x.astype(jnp.float32)
    pv = pvec_ref[...]                            # (5, D), param dtype

    if use_pre_ln:
        z_f32 = _layer_norm(x_f32, pv[0:1, :], pv[1:2, :])
        z = z_f32.astype(x.dtype)                 # keep MXU operands in model dtype
    else:
        z = x

    # down projection -> ReLU (config.adapter_non_linearity == "relu")
    h = jnp.dot(z, wd_ref[...], preferred_element_type=jnp.float32)
    h = h + bd_ref[...].astype(jnp.float32)       # (1, A) broadcast
    h = jnp.maximum(h, 0.0)

    # up projection
    u = jnp.dot(h.astype(wu_ref.dtype), wu_ref[...],
                preferred_element_type=jnp.float32)
    u = u + pv[4:5, :].astype(jnp.float32)        # b_up

    if use_post_ln:
        u = _layer_norm(u, pv[2:3, :], pv[3:4, :])

    out_ref[...] = (u + x_f32).astype(out_ref.dtype)


def adapter_controller_forward(x, params, *, use_pre_ln=True, use_post_ln=True,
                               tile_rows=None, vmem_limit_bytes=None):
    """x: (batch, seq, input_dim). params: dict for the selected task's adapter."""
    B, S, D = x.shape
    A = params["w_down"].shape[1]
    N = B * S

    x_itemsize = jnp.dtype(x.dtype).itemsize
    w_itemsize = jnp.dtype(params["w_down"].dtype).itemsize
    # sublane packing: 8 rows for 32-bit, 16 for bf16, 32 for 8-bit dtypes
    row_align = max(8, 32 // x_itemsize)

    if tile_rows is None:
        # Large tiles amortize the ~0.35us/step pipeline cost and maximize DMA
        # size (this kernel is HBM-bandwidth bound); 512 is a good default on
        # v5e/v6e and still fits v7x's 64 MiB VMEM for typical D.
        tile_rows = min(512, _round_up(N, row_align))
    tile_rows = _round_up(tile_rows, row_align)

    n_pad = _round_up(N, tile_rows)
    xf = x.reshape(N, D)
    if n_pad != N:
        xf = jnp.pad(xf, ((0, n_pad - N), (0, 0)))   # padded rows computed, discarded

    # Pack the five (1, D) parameter vectors into one operand (one DMA / buffer).
    pvec = jnp.concatenate([params["pre_gamma"], params["pre_beta"],
                            params["post_gamma"], params["post_beta"],
                            params["b_up"]], axis=0)  # (5, D)

    if vmem_limit_bytes is None:
        tile_bytes = 2 * (2 * tile_rows * D * x_itemsize)            # x + out, double-buffered
        weight_bytes = 2 * (2 * D * A + A + 5 * D) * w_itemsize      # W_down/W_up/bd/pvec
        budget = int(1.5 * (tile_bytes + weight_bytes)) + (4 << 20)
        # Clamp so the request is valid on every generation (v7x: 64 MiB physical VMEM).
        vmem_limit_bytes = max(32 << 20, min(budget, 64 << 20))

    kern = functools.partial(adapter_kernel,
                             use_pre_ln=use_pre_ln, use_post_ln=use_post_ln)

    full = lambda i: (0, 0)  # weights/params replicated across the row grid

    weight_hbm_bytes = (2 * D * A + A + 5 * D) * w_itemsize
    cost = pl.CostEstimate(
        flops=4 * n_pad * D * A,                 # two matmuls, 2 flops/MAC
        transcendentals=2 * n_pad,               # rsqrt per row per LayerNorm
        bytes_accessed=2 * n_pad * D * x_itemsize + weight_hbm_bytes,
    )

    out = pl.pallas_call(
        kern,
        out_shape=jax.ShapeDtypeStruct((n_pad, D), x.dtype),
        grid_spec=pltpu.PrefetchScalarGridSpec(
            num_scalar_prefetch=0,
            grid=(n_pad // tile_rows,),
            in_specs=[
                pl.BlockSpec((tile_rows, D), lambda i: (i, 0)),  # x rows
                pl.BlockSpec((D, A), full),                      # W_down
                pl.BlockSpec((1, A), full),                      # b_down
                pl.BlockSpec((A, D), full),                      # W_up
                pl.BlockSpec((5, D), full),                      # packed LN/b_up vectors
            ],
            out_specs=pl.BlockSpec((tile_rows, D), lambda i: (i, 0)),
        ),
        compiler_params=pltpu.CompilerParams(
            dimension_semantics=("parallel",),
            vmem_limit_bytes=vmem_limit_bytes),
        cost_estimate=cost,
    )(xf,
      params["w_down"], params["b_down"], params["w_up"], pvec)

    return out[:N].reshape(B, S, D)


def _reference(x, p, use_pre_ln=True, use_post_ln=True):
    def ln(v, g, b, eps=1e-5):
        m = jnp.mean(v, axis=-1, keepdims=True)
        c = v - m
        var = jnp.mean(c * c, axis=-1, keepdims=True)
        return c * jax.lax.rsqrt(var + eps) * g + b

    z = ln(x, p["pre_gamma"], p["pre_beta"]) if use_pre_ln else x
    h = jnp.maximum(z @ p["w_down"] + p["b_down"], 0.0)
    u = h @ p["w_up"] + p["b_up"]
    if use_post_ln:
        u = ln(u, p["post_gamma"], p["post_beta"])
    return u + x


def make_adapter_params(key, input_dim, adapter_dim, weight_init_range=1e-2):
    """Deterministic init matching Adapter.__init__ shapes:
       down_proj: Linear(input_dim, adapter_dim)  (weight normal(std), bias 0)
       up_proj:   Linear(adapter_dim, input_dim)
       LayerNorms: weight=1, bias=0."""
    k1, k2 = jax.random.split(key)
    return {
        # stored already transposed so the kernel does x @ W
        "w_down": (jax.random.normal(k1, (input_dim, adapter_dim), jnp.float32)
                   * weight_init_range),
        "b_down": jnp.zeros((1, adapter_dim), jnp.float32),
        "w_up": (jax.random.normal(k2, (adapter_dim, input_dim), jnp.float32)
                 * weight_init_range),
        "b_up": jnp.zeros((1, input_dim), jnp.float32),
        "pre_gamma": jnp.ones((1, input_dim), jnp.float32),
        "pre_beta": jnp.zeros((1, input_dim), jnp.float32),
        "post_gamma": jnp.ones((1, input_dim), jnp.float32),
        "post_beta": jnp.zeros((1, input_dim), jnp.float32),
    }


if __name__ == "__main__":
    key = jax.random.PRNGKey(0)
    kx, ka, kb, kx2 = jax.random.split(key, 4)

    # ---- case 1: small toy config (matches the module's toy sizes) ----
    batch, seq, input_dim, adapter_dim = 2, 8, 32, 16
    tasks = ["taskA", "taskB"]

    # One adapter per task (ModuleDict equivalent); forward selects one.
    adapters = {
        "taskA": make_adapter_params(ka, input_dim, adapter_dim),
        "taskB": make_adapter_params(kb, input_dim, adapter_dim),
    }
    task_to_adapter = {t: t for t in tasks}

    x = jax.random.normal(kx, (batch, seq, input_dim), jnp.float32)
    params = adapters[task_to_adapter["taskA"]]

    out = adapter_controller_forward(x, params, use_pre_ln=True, use_post_ln=True)
    out = jax.block_until_ready(out)
    ref = _reference(x, params)
    assert out.shape == (batch, seq, input_dim)
    assert jnp.allclose(out, ref, atol=1e-5, rtol=1e-5), "mismatch vs reference (case 1)"

    # ---- case 2: non-tile-divisible row count + lane-aligned D, no post-LN ----
    b2, s2, d2, a2 = 3, 7, 128, 16
    params2 = make_adapter_params(kb, d2, a2)
    x2 = jax.random.normal(kx2, (b2, s2, d2), jnp.float32)
    out2 = adapter_controller_forward(x2, params2, use_pre_ln=True, use_post_ln=False)
    out2 = jax.block_until_ready(out2)
    ref2 = _reference(x2, params2, use_pre_ln=True, use_post_ln=False)
    assert out2.shape == (b2, s2, d2)
    assert jnp.allclose(out2, ref2, atol=1e-5, rtol=1e-5), "mismatch vs reference (case 2)"

    print("KERNEL_OK")
</pallas_src>

<mosaic_0001>
module attributes {stable_mosaic.version = 11 : i64} {
  func.func @adapter_kernel(%arg0: i32, %arg1: memref<16x32xf32, #tpu.memory_space<vmem>>, %arg2: memref<32x16xf32, #tpu.memory_space<vmem>>, %arg3: memref<1x16xf32, #tpu.memory_space<vmem>>, %arg4: memref<16x32xf32, #tpu.memory_space<vmem>>, %arg5: memref<5x32xf32, #tpu.memory_space<vmem>>, %arg6: memref<16x32xf32, #tpu.memory_space<vmem>>) attributes {dimension_semantics = [#tpu.dimension_semantics<parallel>], iteration_bounds = array<i64: 1>, scalar_prefetch = 0 : i64, scratch_operands = 0 : i64, tpu.core_type = #tpu.core_type<tc>, window_params = [{transform_indices = @transform_0, window_bounds = array<i64: 16, 32>}, {pipeline_mode = #tpu.pipeline_mode<synchronous>, transform_indices = @transform_1, window_bounds = array<i64: 32, 16>}, {pipeline_mode = #tpu.pipeline_mode<synchronous>, transform_indices = @transform_2, window_bounds = array<i64: 1, 16>}, {pipeline_mode = #tpu.pipeline_mode<synchronous>, transform_indices = @transform_3, window_bounds = array<i64: 16, 32>}, {pipeline_mode = #tpu.pipeline_mode<synchronous>, transform_indices = @transform_4, window_bounds = array<i64: 5, 32>}, {transform_indices = @transform_5, window_bounds = array<i64: 16, 32>}]} {
    %c0 = arith.constant 0 : index
    %c0_0 = arith.constant 0 : index
    %0 = vector.load %arg1[%c0, %c0_0] : memref<16x32xf32, #tpu.memory_space<vmem>>, vector<16x32xf32>
    %c0_1 = arith.constant 0 : index
    %c0_2 = arith.constant 0 : index
    %1 = vector.load %arg5[%c0_1, %c0_2] : memref<5x32xf32, #tpu.memory_space<vmem>>, vector<5x32xf32>
    %2 = vector.extract_strided_slice %1 {offsets = [0, 0], sizes = [1, 32], strides = [1, 1]} : vector<5x32xf32> to vector<1x32xf32>
    %3 = vector.extract_strided_slice %1 {offsets = [1, 0], sizes = [1, 32], strides = [1, 1]} : vector<5x32xf32> to vector<1x32xf32>
    %cst = arith.constant dense<0.000000e+00> : vector<16xf32>
    %4 = vector.multi_reduction <add>, %0, %cst [1] : vector<16x32xf32> to vector<16xf32>
    %5 = vector.shape_cast %4 : vector<16xf32> to vector<16x1xf32>
    %cst_3 = arith.constant 3.200000e+01 : f32
    %6 = vector.broadcast %cst_3 : f32 to vector<16x1xf32>
    %7 = arith.divf %5, %6 : vector<16x1xf32>
    %8 = vector.broadcast %7 : vector<16x1xf32> to vector<16x32xf32>
    %9 = arith.subf %0, %8 : vector<16x32xf32>
    %10 = arith.mulf %9, %9 : vector<16x32xf32>
    %cst_4 = arith.constant dense<0.000000e+00> : vector<16xf32>
    %11 = vector.multi_reduction <add>, %10, %cst_4 [1] : vector<16x32xf32> to vector<16xf32>
    %12 = vector.shape_cast %11 : vector<16xf32> to vector<16x1xf32>
    %cst_5 = arith.constant 3.200000e+01 : f32
    %13 = vector.broadcast %cst_5 : f32 to vector<16x1xf32>
    %14 = arith.divf %12, %13 : vector<16x1xf32>
    %cst_6 = arith.constant 9.99999974E-6 : f32
    %15 = vector.broadcast %cst_6 : f32 to vector<16x1xf32>
    %16 = arith.addf %14, %15 : vector<16x1xf32>
    %17 = math.rsqrt %16 : vector<16x1xf32>
    %18 = vector.broadcast %17 : vector<16x1xf32> to vector<16x32xf32>
    %19 = arith.mulf %9, %18 : vector<16x32xf32>
    %20 = vector.broadcast %2 : vector<1x32xf32> to vector<16x32xf32>
    %21 = arith.mulf %19, %20 : vector<16x32xf32>
    %22 = vector.broadcast %3 : vector<1x32xf32> to vector<16x32xf32>
    %23 = arith.addf %21, %22 : vector<16x32xf32>
    %c0_7 = arith.constant 0 : index
    %c0_8 = arith.constant 0 : index
    %24 = vector.load %arg2[%c0_7, %c0_8] : memref<32x16xf32, #tpu.memory_space<vmem>>, vector<32x16xf32>
    %cst_9 = arith.constant dense<0.000000e+00> : vector<16x16xf32>
    %25 = tpu.matmul %23, %24, %cst_9 {dimension_numbers = #tpu.dot_dimension_numbers<[1], [0], [0], [1], [0, 0, 1, 1], [], []>} : vector<16x32xf32>, vector<32x16xf32>, vector<16x16xf32> -> vector<16x16xf32>
    %c0_10 = arith.constant 0 : index
    %c0_11 = arith.constant 0 : index
    %26 = vector.load %arg3[%c0_10, %c0_11] : memref<1x16xf32, #tpu.memory_space<vmem>>, vector<1x16xf32>
    %27 = vector.broadcast %26 : vector<1x16xf32> to vector<16x16xf32>
    %28 = arith.addf %25, %27 : vector<16x16xf32>
    %cst_12 = arith.constant 0.000000e+00 : f32
    %29 = vector.broadcast %cst_12 : f32 to vector<16x16xf32>
    %30 = arith.maximumf %28, %29 : vector<16x16xf32>
    %c0_13 = arith.constant 0 : index
    %c0_14 = arith.constant 0 : index
    %31 = vector.load %arg4[%c0_13, %c0_14] : memref<16x32xf32, #tpu.memory_space<vmem>>, vector<16x32xf32>
    %cst_15 = arith.constant dense<0.000000e+00> : vector<16x32xf32>
    %32 = tpu.matmul %30, %31, %cst_15 {dimension_numbers = #tpu.dot_dimension_numbers<[1], [0], [0], [1], [0, 0, 1, 1], [], []>} : vector<16x16xf32>, vector<16x32xf32>, vector<16x32xf32> -> vector<16x32xf32>
    %33 = vector.extract_strided_slice %1 {offsets = [4, 0], sizes = [1, 32], strides = [1, 1]} : vector<5x32xf32> to vector<1x32xf32>
    %34 = vector.broadcast %33 : vector<1x32xf32> to vector<16x32xf32>
    %35 = arith.addf %32, %34 : vector<16x32xf32>
    %36 = vector.extract_strided_slice %1 {offsets = [2, 0], sizes = [1, 32], strides = [1, 1]} : vector<5x32xf32> to vector<1x32xf32>
    %37 = vector.extract_strided_slice %1 {offsets = [3, 0], sizes = [1, 32], strides = [1, 1]} : vector<5x32xf32> to vector<1x32xf32>
    %cst_16 = arith.constant dense<0.000000e+00> : vector<16xf32>
    %38 = vector.multi_reduction <add>, %35, %cst_16 [1] : vector<16x32xf32> to vector<16xf32>
    %39 = vector.shape_cast %38 : vector<16xf32> to vector<16x1xf32>
    %cst_17 = arith.constant 3.200000e+01 : f32
    %40 = vector.broadcast %cst_17 : f32 to vector<16x1xf32>
    %41 = arith.divf %39, %40 : vector<16x1xf32>
    %42 = vector.broadcast %41 : vector<16x1xf32> to vector<16x32xf32>
    %43 = arith.subf %35, %42 : vector<16x32xf32>
    %44 = arith.mulf %43, %43 : vector<16x32xf32>
    %cst_18 = arith.constant dense<0.000000e+00> : vector<16xf32>
    %45 = vector.multi_reduction <add>, %44, %cst_18 [1] : vector<16x32xf32> to vector<16xf32>
    %46 = vector.shape_cast %45 : vector<16xf32> to vector<16x1xf32>
    %cst_19 = arith.constant 3.200000e+01 : f32
    %47 = vector.broadcast %cst_19 : f32 to vector<16x1xf32>
    %48 = arith.divf %46, %47 : vector<16x1xf32>
    %cst_20 = arith.constant 9.99999974E-6 : f32
    %49 = vector.broadcast %cst_20 : f32 to vector<16x1xf32>
    %50 = arith.addf %48, %49 : vector<16x1xf32>
    %51 = math.rsqrt %50 : vector<16x1xf32>
    %52 = vector.broadcast %51 : vector<16x1xf32> to vector<16x32xf32>
    %53 = arith.mulf %43, %52 : vector<16x32xf32>
    %54 = vector.broadcast %36 : vector<1x32xf32> to vector<16x32xf32>
    %55 = arith.mulf %53, %54 : vector<16x32xf32>
    %56 = vector.broadcast %37 : vector<1x32xf32> to vector<16x32xf32>
    %57 = arith.addf %55, %56 : vector<16x32xf32>
    %58 = arith.addf %57, %0 : vector<16x32xf32>
    %c0_21 = arith.constant 0 : index
    %c0_22 = arith.constant 0 : index
    %59 = vector.load %arg6[%c0_21, %c0_22] : memref<16x32xf32, #tpu.memory_space<vmem>>, vector<16x32xf32>
    tpu.vector_store %arg6[%c0_21, %c0_22], %58 {strides = array<i32>} : memref<16x32xf32, #tpu.memory_space<vmem>>, vector<16x32xf32>,
    return
  }
  func.func @transform_0(%arg0: i32) -> (i32, i32) {
    %c0_i32 = arith.constant 0 : i32
    %c0_i32_0 = arith.constant 0 : i32
    return %arg0, %c0_i32 : i32, i32
  }
  func.func @transform_1(%arg0: i32) -> (i32, i32) {
    %c0_i32 = arith.constant 0 : i32
    %c0_i32_0 = arith.constant 0 : i32
    %c0_i32_1 = arith.constant 0 : i32
    return %c0_i32, %c0_i32_0 : i32, i32
  }
  func.func @transform_2(%arg0: i32) -> (i32, i32) {
    %c0_i32 = arith.constant 0 : i32
    %c0_i32_0 = arith.constant 0 : i32
    %c0_i32_1 = arith.constant 0 : i32
    return %c0_i32, %c0_i32_0 : i32, i32
  }
  func.func @transform_3(%arg0: i32) -> (i32, i32) {
    %c0_i32 = arith.constant 0 : i32
    %c0_i32_0 = arith.constant 0 : i32
    %c0_i32_1 = arith.constant 0 : i32
    return %c0_i32, %c0_i32_0 : i32, i32
  }
  func.func @transform_4(%arg0: i32) -> (i32, i32) {
    %c0_i32 = arith.constant 0 : i32
    %c0_i32_0 = arith.constant 0 : i32
    %c0_i32_1 = arith.constant 0 : i32
    return %c0_i32, %c0_i32_0 : i32, i32
  }
  func.func @transform_5(%arg0: i32) -> (i32, i32) {
    %c0_i32 = arith.constant 0 : i32
    %c0_i32_0 = arith.constant 0 : i32
    return %arg0, %c0_i32 : i32, i32
  }
}

</mosaic_0001>

<llo_original>
// kernel: tpu_custom_call.1
$region0: #{tpu_custom_call.1}
  #allocation0 [shape = 'u32[]', space=smem, size = 0x4, offset = 0x4, fixed_abs, tag = 'smem constant byte address 0x4 - core index']
  #allocation1 [shape = 'u32[72,128]{1,0:T(1,128)}', space=vmem, size = 0x9000, scoped, tag = 'internal scratch']
  %s0 = inlined_call_operand.vmem [shape: f32[16,32], index: 0, kind: input, shape index: {}]
  %s1 = inlined_call_operand.vmem [shape: f32[32,16], index: 1, kind: input, shape index: {}]
  %s2 = inlined_call_operand.vmem [shape: f32[1,16], index: 2, kind: input, shape index: {}]
  %s3 = inlined_call_operand.vmem [shape: f32[16,32], index: 3, kind: input, shape index: {}]
  %s4 = inlined_call_operand.vmem [shape: f32[5,32], index: 4, kind: input, shape index: {}]
  %s5 = inlined_call_operand.hbm [shape: f32[16,32], index: 5, kind: output, shape index: {}]
  %s6 = sld [smem:[#allocation0]]
  $region30: #{tpu_custom_call.1} parent=0
    _
  %s8 = ssub.s32 1, %s6
  %s9 = scalar_select 0, %s8, %s6
  $region1: #{tpu_custom_call.1} parent=0
    #allocation2 [shape = 'u8[8192]{0}', space=vmem, size = 0x2000, scoped, tag = 'output window, operand 0, single buffered']
    #allocation3 [shape = 's32[1]{0}', space=sflag, size = 0x4, scoped, tag = 'scoped memory for tpu_custom_call.1']
    %10 = vsyncpa [#allocation3], 0
    // Predicated region
    $region2: #{tpu_custom_call.1} parent=1 // pred_check
      _
    $region3: #{tpu_custom_call.1} parent=1 // pred_check_branch
      %12 = sbr.rel (0) target = $region5
    $region4: #{tpu_custom_call.1} parent=1 // pred_region
      _
    $region5: #{tpu_custom_call.1} parent=1 // pred_fallthru
      _
    // Predicated region
    $region6: #{tpu_custom_call.1} parent=1 // pred_check
      _
    $region7: #{tpu_custom_call.1} parent=1 // pred_check_branch
      %14 = sbr.rel (0) target = $region9
    $region8: #{tpu_custom_call.1} parent=1 // pred_region
      _
    $region9: #{tpu_custom_call.1} parent=1 // pred_fallthru
      _
    // Predicated region
    $region10: #{tpu_custom_call.1} parent=1 // pred_check
      _
    $region11: #{tpu_custom_call.1} parent=1 // pred_check_branch
      %16 = sbr.rel (0) target = $region13
    $region12: #{tpu_custom_call.1} parent=1 // pred_region
      _
    $region13: #{tpu_custom_call.1} parent=1 // pred_fallthru
      _
    // Predicated region
    $region14: #{tpu_custom_call.1} parent=1 // pred_check
      _
    $region15: #{tpu_custom_call.1} parent=1 // pred_check_branch
      %18 = sbr.rel (0) target = $region17
    $region16: #{tpu_custom_call.1} parent=1 // pred_region
      _
    $region17: #{tpu_custom_call.1} parent=1 // pred_fallthru
      _
    // Predicated region
    $region18: #{tpu_custom_call.1} parent=1 // pred_check
      _
    $region19: #{tpu_custom_call.1} parent=1 // pred_check_branch
      %20 = sbr.rel (0) target = $region21
    $region20: #{tpu_custom_call.1} parent=1 // pred_region
      _
    $region21: #{tpu_custom_call.1} parent=1 // pred_fallthru
      _
    %v21 = vld [vmem:[%s0] sm:$0xff]
    %v22 = vld [vmem:[%s0 + $0x8] sm:$0xff]
    %v23 = vld [vmem:[%s4] sm:$0x1f]
    %vm24 = vcmask 261120
    %v25 = vsel %vm24, %v21, 0.0
    %26 = vadd.xlane.f32.xlu0 %v25
    %v27 = vpop.xlane.xlu0 %26
    %v28 = vsel %vm24, %v22, 0.0
    %29 = vadd.xlane.f32.xlu0 %v28
    %v30 = vpop.xlane.xlu0 %29
    %v31 = vrcp.pop 32.0
    %v32 = vmul.f32 32.0, %v31
    %v33 = vsub.f32 1.0, %v32
    %v34 = vmul.f32 %v31, %v33
    %v35 = vadd.f32 %v31, %v34
    %vm36 = vweird.f32 %v31
    %v37 = vsel %vm36, %v31, %v35
    %v38 = vmul.f32 %v27, %v37
    %v39 = vmul.f32 %v30, %v37
    %v40 = vsub.f32 %v21, %v38
    %v41 = vsub.f32 %v22, %v39
    %v42 = vmul.f32 %v40, %v40
    %v43 = vmul.f32 %v41, %v41
    %v44 = vsel %vm24, %v42, 0.0
    %45 = vadd.xlane.f32.xlu0 %v44
    %v46 = vpop.xlane.xlu0 %45
    %v47 = vsel %vm24, %v43, 0.0
    %48 = vadd.xlane.f32.xlu0 %v47
    %v49 = vpop.xlane.xlu0 %48
    %v50 = vmul.f32 %v46, %v37
    %v51 = vmul.f32 %v49, %v37
    %v52 = vadd.f32 %v50, 1e-05
    %v53 = vadd.f32 %v51, 1e-05
    %v54 = vrsqrt.pop %v52
    %v55 = vmul.f32 %v54, %v52
    %v56 = vmul.f32 %v55, %v54
    %v57 = vmul.f32 0.5, %v56
    %v58 = vsub.f32 1.5, %v57
    %v59 = vmul.f32 %v54, %v58
    %vm60 = vweird.f32 %v52
    %vm61 = vweird.f32 %v54
    %vm62 = vmor %vm60, %vm61
    %v63 = vsel %vm62, %v54, %v59
    %v64 = vrsqrt.pop %v53
    %v65 = vmul.f32 %v64, %v53
    %v66 = vmul.f32 %v65, %v64
    %v67 = vmul.f32 0.5, %v66
    %v68 = vsub.f32 1.5, %v67
    %v69 = vmul.f32 %v64, %v68
    %vm70 = vweird.f32 %v53
    %vm71 = vweird.f32 %v64
    %vm72 = vmor %vm70, %vm71
    %v73 = vsel %vm72, %v64, %v69
    %v74 = vmul.f32 %v40, %v63
    %v75 = vmul.f32 %v41, %v73
    %v76 = vperm.slane %v23, 0
    %v77 = vmul.f32 %v74, %v76
    %v78 = vmul.f32 %v75, %v76
    %v79 = vperm.slane %v23, 1
    %v80 = vadd.f32 %v77, %v79
    %v81 = vadd.f32 %v78, %v79
    %v82 = vld [vmem:[%s1] sm:$0xff]
    %v83 = vld [vmem:[%s1 + $0x8] sm:$0xff]
    %v84 = vld [vmem:[%s1 + $0x10] sm:$0xff]
    %v85 = vld [vmem:[%s1 + $0x18] sm:$0xff]
    %v86 = vld [vmem:[%s2] sm:$0x1]
    %v88 = vperm.slane %v86, 0
    %v91 = vsel %vm24, %v80, 0
    %v94 = vsel %vm24, %v81, 0
    %96 = vmatpush.msra.mxu0 0.0
    %97 = vmatpush.msra.mxu0 0.0
    %98 = vmatpush.msra.mxu0 0.0
    %99 = vmatpush.msra.mxu0 0.0
    %100 = vmatpush.msra.mxu0 0.0
    %101 = vmatpush.msra.mxu0 0.0
    %102 = vmatpush.msra.mxu0 0.0
    %103 = vmatpush.msra.mxu0 0.0
    %104 = vmatpush.msra.mxu0 0.0
    %105 = vmatpush.msra.mxu0 0.0
    %106 = vmatpush.msra.mxu0 0.0
    %107 = vmatpush.msra.mxu0 0.0
    %108 = vmatpush.msra.mxu0 %v85
    %109 = vmatpush.msra.mxu0 %v84
    %110 = vmatpush.msra.mxu0 %v83
    %111 = vmatpush.msra.mxu0 %v82
    %112 = vmatmul.f32.gmra.mxu0 %v91
    %v113 = vpop.f32.mrf.mxu0
    %v114 = vadd.f32 %v88, %v113
    %115 = vmatmul.f32.gmra.mxu0 %v94
    %v116 = vpop.f32.mrf.mxu0
    %v117 = vadd.f32 %v88, %v116
    %118 = vdwg.mxu0
    %v119 = vmax.f32 %v114, 0.0
    %v120 = vmax.f32 %v117, 0.0
    %v121 = vld [vmem:[%s3] sm:$0xff]
    %v122 = vld [vmem:[%s3 + $0x8] sm:$0xff]
    %v123 = vperm.slane %v23, 4
    %vm124 = vcmask 130048
    %v126 = vsel %vm124, %v119, 0
    %v129 = vsel %vm124, %v120, 0
    %131 = vmatpush.msra.mxu0 0.0
    %132 = vmatpush.msra.mxu0 0.0
    %133 = vmatpush.msra.mxu0 0.0
    %134 = vmatpush.msra.mxu0 0.0
    %135 = vmatpush.msra.mxu0 0.0
    %136 = vmatpush.msra.mxu0 0.0
    %137 = vmatpush.msra.mxu0 0.0
    %138 = vmatpush.msra.mxu0 0.0
    %139 = vmatpush.msra.mxu0 0.0
    %140 = vmatpush.msra.mxu0 0.0
    %141 = vmatpush.msra.mxu0 0.0
    %142 = vmatpush.msra.mxu0 0.0
    %143 = vmatpush.msra.mxu0 0.0
    %144 = vmatpush.msra.mxu0 0.0
    %145 = vmatpush.msra.mxu0 %v122
    %146 = vmatpush.msra.mxu0 %v121
    %147 = vmatmul.f32.gmra.mxu0 %v126
    %v148 = vpop.f32.mrf.mxu0
    %v149 = vadd.f32 %v123, %v148
    %150 = vmatmul.f32.gmra.mxu0 %v129
    %v151 = vpop.f32.mrf.mxu0
    %v152 = vadd.f32 %v123, %v151
    %153 = vdwg.mxu0
    %v154 = vsel %vm24, %v149, 0.0
    %155 = vadd.xlane.f32.xlu0 %v154
    %v156 = vpop.xlane.xlu0 %155
    %v157 = vsel %vm24, %v152, 0.0
    %158 = vadd.xlane.f32.xlu0 %v157
    %v159 = vpop.xlane.xlu0 %158
    %v160 = vmul.f32 %v156, %v37
    %v161 = vmul.f32 %v159, %v37
    %v162 = vsub.f32 %v149, %v160
    %v163 = vsub.f32 %v152, %v161
    %v164 = vmul.f32 %v162, %v162
    %v165 = vmul.f32 %v163, %v163
    %v166 = vsel %vm24, %v164, 0.0
    %167 = vadd.xlane.f32.xlu0 %v166
    %v168 = vpop.xlane.xlu0 %167
    %v169 = vsel %vm24, %v165, 0.0
    %170 = vadd.xlane.f32.xlu0 %v169
    %v171 = vpop.xlane.xlu0 %170
    %v172 = vmul.f32 %v168, %v37
    %v173 = vmul.f32 %v171, %v37
    %v174 = vadd.f32 %v172, 1e-05
    %v175 = vadd.f32 %v173, 1e-05
    %v176 = vrsqrt.pop %v174
    %v177 = vmul.f32 %v176, %v174
    %v178 = vmul.f32 %v177, %v176
    %v179 = vmul.f32 0.5, %v178
    %v180 = vsub.f32 1.5, %v179
    %v181 = vmul.f32 %v176, %v180
    %vm182 = vweird.f32 %v174
    %vm183 = vweird.f32 %v176
    %vm184 = vmor %vm182, %vm183
    %v185 = vsel %vm184, %v176, %v181
    %v186 = vrsqrt.pop %v175
    %v187 = vmul.f32 %v186, %v175
    %v188 = vmul.f32 %v187, %v186
    %v189 = vmul.f32 0.5, %v188
    %v190 = vsub.f32 1.5, %v189
    %v191 = vmul.f32 %v186, %v190
    %vm192 = vweird.f32 %v175
    %vm193 = vweird.f32 %v186
    %vm194 = vmor %vm192, %vm193
    %v195 = vsel %vm194, %v186, %v191
    %v196 = vmul.f32 %v162, %v185
    %v197 = vmul.f32 %v163, %v195
    %v198 = vperm.slane %v23, 2
    %v199 = vmul.f32 %v196, %v198
    %v200 = vmul.f32 %v197, %v198
    %v201 = vperm.slane %v23, 3
    %v202 = vadd.f32 %v199, %v201
    %v203 = vadd.f32 %v200, %v201
    %v204 = vadd.f32 %v202, %v21
    %v205 = vadd.f32 %v203, %v22
    %206 = vst.msk [vmem:[#allocation2] sm:$0xff] %vm24, %v204
    %207 = vst.msk [vmem:[#allocation2 + $0x8] sm:$0xff] %vm24, %v205
    // Predicated region
    $region22: #{tpu_custom_call.1} parent=1 // pred_check
      _
    $region23: #{tpu_custom_call.1} parent=1 // pred_check_branch
      %209 = sbr.rel (0) target = $region25
    $region24: #{tpu_custom_call.1} parent=1 // pred_region
      %211 = vsyncadd [#allocation3], 0
      %s212 = sshll.u32 [#allocation2], 4
      %s213 = int_to_ptr.vmem [resolvable:$true] %s212
      %s214 = sshll.u32 %s5, 4
      %s215 = int_to_ptr.hbm [resolvable:$true] %s214
      %220 = dma.vmem_to_hbm [thread:$0]  %s213, 256, %s215, [#allocation3], 128, 128, 8
    $region25: #{tpu_custom_call.1} parent=1 // pred_fallthru
      _
    // Predicated region
    $region26: #{tpu_custom_call.1} parent=1 // pred_check
      _
    $region27: #{tpu_custom_call.1} parent=1 // pred_check_branch
      %222 = sbr.rel (0) target = $region29
    $region28: #{tpu_custom_call.1} parent=1 // pred_region
      %224 = dma.done [#allocation3], 256
    $region29: #{tpu_custom_call.1} parent=1 // pred_fallthru
      _
    %225 = vsyncpa [#allocation3], 1

</llo_original>
